<compile_context>
chip_gen: v6e
topology: v6e:2x2x1
jax: 0.10.0
libtpu: 0.0.40
codegen_flags: <defaults>
</compile_context>

<pallas_src>
import functools

import jax
import jax.numpy as jnp
import numpy as np
from jax import lax
from jax.experimental import pallas as pl
from jax.experimental.pallas import tpu as pltpu


def _round_up(v, m):
    return (v + m - 1) // m * m


def _device_kind():
    try:
        return jax.devices()[0].device_kind.lower()
    except Exception:  # pragma: no cover
        return ""


def _var_loss_kernel(labels_row_ref, labels_col_ref, x_ref, out_ref, *, tile_c, mm_dtype):
    """Per-class variance loss for classes [tile*tile_c, (tile+1)*tile_c)."""
    tile = pl.program_id(0)
    base = tile * tile_c

    labels_row = labels_row_ref[...]            # (1, N) int32, pad entries are -1
    labels_col = labels_col_ref[...]            # (N, 1) int32, pad entries are -1
    x = x_ref[...]                              # (N, D), zero-padded rows/cols

    # ---- group sums: one MXU pass, (TC,N) 0/1 mask @ (N,D) features ---------
    class_col = base + lax.broadcasted_iota(jnp.int32, (tile_c, 1), 0)      # (TC,1)
    mask_cn = (class_col == labels_row).astype(mm_dtype)                    # (TC,N) exact 0/1
    group_sum = jnp.dot(mask_cn, x.astype(mm_dtype),
                        preferred_element_type=jnp.float32)                 # (TC,D) f32
    gs_norm_col = jnp.sum(group_sum * group_sum, axis=1, keepdims=True)     # (TC,1)

    # ---- counts & per-class sum||x||^2: exact f32, classes on lanes ---------
    class_row = base + lax.broadcasted_iota(jnp.int32, (1, tile_c), 1)      # (1,TC)
    mask_nc = (labels_col == class_row).astype(jnp.float32)                 # (N,TC)
    counts = jnp.sum(mask_nc, axis=0, keepdims=True)                        # (1,TC)
    xf = x.astype(jnp.float32)
    x_sq = jnp.sum(xf * xf, axis=1, keepdims=True)                          # (N,1) exact f32
    sum_sq = jnp.sum(mask_nc * x_sq, axis=0, keepdims=True)                 # (1,TC)

    # ---- relayout gs_norm (TC,1) -> (1,TC) without a transpose --------------
    # (select the diagonal of the broadcast and reduce over sublanes; only
    #  TC^2 VPU elements, negligible vs the matmul).
    ri = lax.broadcasted_iota(jnp.int32, (tile_c, tile_c), 0)
    ci = lax.broadcasted_iota(jnp.int32, (tile_c, tile_c), 1)
    gs_norm = jnp.sum(jnp.where(ri == ci, gs_norm_col, 0.0), axis=0, keepdims=True)

    # mean_j ||x_j - mu||^2 = sum_sq / n - ||group_sum||^2 / n^2   (exact divide)
    inv = 1.0 / jnp.maximum(counts, 1.0)
    out_ref[...] = sum_sq * inv - gs_norm * (inv * inv)
    # Empty / padded classes have counts == sum_sq == gs_norm == 0 -> exactly 0.
    # TODO(synk): the original forward contains an ipdb.set_trace() debugger
    # break; it has no computational meaning and is intentionally omitted.


def var_loss(x, labels, num_classes, *, tile_c=None, mm_dtype=None, center=True):
    """x: (N, D) float, labels: (N,) int in [0, num_classes) -> scalar f32 loss.

    NOTE: labels outside [0, num_classes) are silently dropped (the PyTorch code
    groups by whatever label values appear), so num_classes must bound the ids.
    mm_dtype: optional dtype (e.g. jnp.bfloat16) for the group-sum matmul only;
    sum-of-squares and counts always stay f32.
    """
    x = jnp.asarray(x)
    labels = jnp.asarray(labels).astype(jnp.int32)
    n, d = x.shape

    if center:
        # Loss is translation-invariant; subtracting the global feature mean
        # conditions the E[x^2] - ||mu||^2 cancellation (one cheap XLA op).
        xf32 = x.astype(jnp.float32)
        x = (xf32 - jnp.mean(xf32, axis=0, keepdims=True)).astype(x.dtype)

    kind = _device_kind()
    is_v7 = ("v7" in kind) or ("7x" in kind)
    big_mxu = is_v7 or ("v6" in kind)           # 2x256x256 MXU generations

    # Class tiling: 256 rows per tile on v6e/v7x when there are enough classes,
    # 128 on v5e; always a multiple of 8 sublanes and at most ~num_classes.
    if tile_c is None:
        tile_c = 256 if (big_mxu and num_classes >= 256) else 128
    tile_c = _round_up(min(tile_c, _round_up(num_classes, 8)), 8)
    c_pad = _round_up(num_classes, tile_c)
    num_tiles = c_pad // tile_c

    # Batch padded to an MXU-friendly contraction length; features padded to the
    # natural lane multiple only (no augmented columns).
    n_pad = _round_up(n, 128)
    d_pad = _round_up(d, 128)
    x_p = jnp.pad(x, ((0, n_pad - n), (0, d_pad - d)))
    labels_row = jnp.pad(labels.reshape(1, n), ((0, 0), (0, n_pad - n)), constant_values=-1)
    labels_col = jnp.pad(labels.reshape(n, 1), ((0, n_pad - n), (0, 0)), constant_values=-1)

    mm = jnp.dtype(mm_dtype) if mm_dtype is not None else x_p.dtype
    kernel = functools.partial(_var_loss_kernel, tile_c=tile_c, mm_dtype=mm)

    if is_v7:
        vmem_limit = 48 * 1024 * 1024       # 64 MiB/TC physical: leave headroom
    elif "v6" in kind:
        vmem_limit = 100 * 1024 * 1024      # 128 MiB physical: keep x resident
    else:
        vmem_limit = 32 * 1024 * 1024       # v5e & unknown: > 16 MiB scoped default

    def build(single_buffer_inputs, core_parallel):
        # Inputs have constant index maps -> single buffering halves their
        # resident VMEM with no pipelining to lose.
        spec_kw = {"pipeline_mode": pl.Buffered(1)} if single_buffer_inputs else {}
        sem = (pltpu.CORE_PARALLEL,) if core_parallel else ("parallel",)
        return pl.pallas_call(
            kernel,
            out_shape=jax.ShapeDtypeStruct((1, c_pad), jnp.float32),
            grid=(num_tiles,),
            in_specs=[
                pl.BlockSpec((1, n_pad), lambda i: (0, 0), **spec_kw),       # labels (row)
                pl.BlockSpec((n_pad, 1), lambda i: (0, 0), **spec_kw),       # labels (col)
                pl.BlockSpec((n_pad, d_pad), lambda i: (0, 0), **spec_kw),   # features
            ],
            out_specs=pl.BlockSpec((1, tile_c), lambda i: (0, i)),           # lane-dense
            compiler_params=pltpu.CompilerParams(
                dimension_semantics=sem,
                vmem_limit_bytes=vmem_limit,
            ),
        )

    # On v7x, explicitly split class tiles across the two TensorCores when the
    # tile count divides evenly; elsewhere plain "parallel" is sufficient.
    want_core_parallel = is_v7 and num_tiles >= 2 and num_tiles % 2 == 0
    try:
        per_class = build(True, want_core_parallel)(labels_row, labels_col, x_p)
    except Exception:  # pragma: no cover - older jax: no Buffered(1)/CORE_PARALLEL
        per_class = build(False, False)(labels_row, labels_col, x_p)

    return jnp.sum(per_class)


def _reference_var_loss(x_np, labels_np):
    """Plain numpy re-implementation of the PyTorch forward (for checking)."""
    loss = 0.0
    for pid in sorted(set(int(v) for v in labels_np)):
        grp = x_np[labels_np == pid, :]                  # (n_k, D)
        mu = grp.mean(axis=0, keepdims=True)             # (1, D)
        dist = (mu ** 2).sum(1, keepdims=True) + (grp ** 2).sum(1)[None, :] \
            - 2.0 * mu @ grp.T                           # (1, n_k)
        loss += dist.mean()
    return np.float32(loss)


if __name__ == "__main__":
    key = jax.random.PRNGKey(0)
    k1, k2 = jax.random.split(key)

    N, D, C = 8, 32, 4  # small synthetic shapes (module default feat_dim=768)
    x = jax.random.normal(k1, (N, D), dtype=jnp.float32)
    labels = jax.random.randint(k2, (N,), 0, C, dtype=jnp.int32)

    ref = _reference_var_loss(np.asarray(x), np.asarray(labels))

    # Default (input-dtype) matmul path.
    loss = jax.block_until_ready(var_loss(x, labels, num_classes=C))
    assert np.allclose(np.asarray(loss), ref, rtol=1e-2, atol=1e-2), (loss, ref)

    # Optional bf16 group-sum matmul (sum_sq / counts stay f32): validate accuracy.
    loss_bf16 = jax.block_until_ready(var_loss(x, labels, num_classes=C,
                                               mm_dtype=jnp.bfloat16))
    assert np.allclose(np.asarray(loss_bf16), ref, rtol=2e-2, atol=2e-2), (loss_bf16, ref)

    print("KERNEL_OK")
</pallas_src>

<mosaic_0001>
module attributes {stable_mosaic.version = 11 : i64} {
  func.func @_var_loss_kernel(%arg0: i32, %arg1: memref<1x128xi32, #tpu.memory_space<vmem>>, %arg2: memref<128x1xi32, #tpu.memory_space<vmem>>, %arg3: memref<128x128xf32, #tpu.memory_space<vmem>>, %arg4: memref<1x8xf32, #tpu.memory_space<vmem>>) attributes {dimension_semantics = [#tpu.dimension_semantics<parallel>], iteration_bounds = array<i64: 1>, scalar_prefetch = 0 : i64, scratch_operands = 0 : i64, tpu.core_type = #tpu.core_type<tc>, window_params = [{pipeline_mode = #tpu.pipeline_mode<synchronous>, transform_indices = @transform_0, window_bounds = array<i64: 1, 128>}, {pipeline_mode = #tpu.pipeline_mode<synchronous>, transform_indices = @transform_1, window_bounds = array<i64: 128, 1>}, {pipeline_mode = #tpu.pipeline_mode<synchronous>, transform_indices = @transform_2, window_bounds = array<i64: 128, 128>}, {transform_indices = @transform_3, window_bounds = array<i64: 1, 8>}]} {
    %c8_i32 = arith.constant 8 : i32
    %0 = arith.muli %arg0, %c8_i32 : i32
    %c0 = arith.constant 0 : index
    %c0_0 = arith.constant 0 : index
    %1 = vector.load %arg1[%c0, %c0_0] : memref<1x128xi32, #tpu.memory_space<vmem>>, vector<1x128xi32>
    %c0_1 = arith.constant 0 : index
    %c0_2 = arith.constant 0 : index
    %2 = vector.load %arg2[%c0_1, %c0_2] : memref<128x1xi32, #tpu.memory_space<vmem>>, vector<128x1xi32>
    %c0_3 = arith.constant 0 : index
    %c0_4 = arith.constant 0 : index
    %3 = vector.load %arg3[%c0_3, %c0_4] : memref<128x128xf32, #tpu.memory_space<vmem>>, vector<128x128xf32>
    %4 = tpu.iota {dimensions = array<i32: 0>} : vector<8x1xi32>
    %5 = vector.broadcast %0 : i32 to vector<8x1xi32>
    %6 = arith.addi %5, %4 : vector<8x1xi32>
    %7 = vector.broadcast %6 : vector<8x1xi32> to vector<8x128xi32>
    %8 = vector.broadcast %1 : vector<1x128xi32> to vector<8x128xi32>
    %9 = arith.cmpi eq, %7, %8 : vector<8x128xi32>
    %10 = arith.extui %9 : vector<8x128xi1> to vector<8x128xi32>
    %11 = arith.sitofp %10 : vector<8x128xi32> to vector<8x128xf32>
    %cst = arith.constant dense<0.000000e+00> : vector<8x128xf32>
    %12 = tpu.matmul %11, %3, %cst {dimension_numbers = #tpu.dot_dimension_numbers<[1], [0], [0], [1], [0, 0, 1, 1], [], []>} : vector<8x128xf32>, vector<128x128xf32>, vector<8x128xf32> -> vector<8x128xf32>
    %13 = arith.mulf %12, %12 : vector<8x128xf32>
    %cst_5 = arith.constant dense<0.000000e+00> : vector<8xf32>
    %14 = vector.multi_reduction <add>, %13, %cst_5 [1] : vector<8x128xf32> to vector<8xf32>
    %15 = vector.shape_cast %14 : vector<8xf32> to vector<8x1xf32>
    %16 = tpu.iota {dimensions = array<i32: 1>} : vector<1x8xi32>
    %17 = vector.broadcast %0 : i32 to vector<1x8xi32>
    %18 = arith.addi %17, %16 : vector<1x8xi32>
    %19 = vector.broadcast %2 : vector<128x1xi32> to vector<128x8xi32>
    %20 = vector.broadcast %18 : vector<1x8xi32> to vector<128x8xi32>
    %21 = arith.cmpi eq, %19, %20 : vector<128x8xi32>
    %22 = arith.extui %21 : vector<128x8xi1> to vector<128x8xi32>
    %23 = arith.sitofp %22 : vector<128x8xi32> to vector<128x8xf32>
    %cst_6 = arith.constant dense<0.000000e+00> : vector<8xf32>
    %24 = vector.multi_reduction <add>, %23, %cst_6 [0] : vector<128x8xf32> to vector<8xf32>
    %25 = vector.shape_cast %24 : vector<8xf32> to vector<1x8xf32>
    %26 = arith.mulf %3, %3 : vector<128x128xf32>
    %cst_7 = arith.constant dense<0.000000e+00> : vector<128xf32>
    %27 = vector.multi_reduction <add>, %26, %cst_7 [1] : vector<128x128xf32> to vector<128xf32>
    %28 = vector.shape_cast %27 : vector<128xf32> to vector<128x1xf32>
    %29 = vector.broadcast %28 : vector<128x1xf32> to vector<128x8xf32>
    %30 = arith.mulf %23, %29 : vector<128x8xf32>
    %cst_8 = arith.constant dense<0.000000e+00> : vector<8xf32>
    %31 = vector.multi_reduction <add>, %30, %cst_8 [0] : vector<128x8xf32> to vector<8xf32>
    %32 = vector.shape_cast %31 : vector<8xf32> to vector<1x8xf32>
    %33 = tpu.iota {dimensions = array<i32: 0>} : vector<8x8xi32>
    %34 = tpu.iota {dimensions = array<i32: 1>} : vector<8x8xi32>
    %35 = arith.cmpi eq, %33, %34 : vector<8x8xi32>
    %cst_9 = arith.constant 0.000000e+00 : f32
    %36 = vector.shape_cast %15 : vector<8x1xf32> to vector<8x1xf32>
    %37 = vector.broadcast %36 : vector<8x1xf32> to vector<8x8xf32>
    %38 = vector.broadcast %cst_9 : f32 to vector<8x8xf32>
    %39 = arith.select %35, %37, %38 : vector<8x8xi1>, vector<8x8xf32>
    %cst_10 = arith.constant dense<0.000000e+00> : vector<8xf32>
    %40 = vector.multi_reduction <add>, %39, %cst_10 [0] : vector<8x8xf32> to vector<8xf32>
    %41 = vector.shape_cast %40 : vector<8xf32> to vector<1x8xf32>
    %cst_11 = arith.constant 1.000000e+00 : f32
    %42 = vector.broadcast %cst_11 : f32 to vector<1x8xf32>
    %43 = arith.maximumf %25, %42 : vector<1x8xf32>
    %cst_12 = arith.constant 1.000000e+00 : f32
    %44 = vector.broadcast %cst_12 : f32 to vector<1x8xf32>
    %45 = arith.divf %44, %43 : vector<1x8xf32>
    %46 = arith.mulf %32, %45 : vector<1x8xf32>
    %47 = arith.mulf %45, %45 : vector<1x8xf32>
    %48 = arith.mulf %41, %47 : vector<1x8xf32>
    %49 = arith.subf %46, %48 : vector<1x8xf32>
    %c0_13 = arith.constant 0 : index
    %c0_14 = arith.constant 0 : index
    %50 = vector.load %arg4[%c0_13, %c0_14] : memref<1x8xf32, #tpu.memory_space<vmem>>, vector<1x8xf32>
    tpu.vector_store %arg4[%c0_13, %c0_14], %49 {strides = array<i32>} : memref<1x8xf32, #tpu.memory_space<vmem>>, vector<1x8xf32>,
    return
  }
  func.func @transform_0(%arg0: i32) -> (i32, i32) {
    %c0_i32 = arith.constant 0 : i32
    %c0_i32_0 = arith.constant 0 : i32
    %c0_i32_1 = arith.constant 0 : i32
    return %c0_i32, %c0_i32_0 : i32, i32
  }
  func.func @transform_1(%arg0: i32) -> (i32, i32) {
    %c0_i32 = arith.constant 0 : i32
    %c0_i32_0 = arith.constant 0 : i32
    %c0_i32_1 = arith.constant 0 : i32
    return %c0_i32, %c0_i32_0 : i32, i32
  }
  func.func @transform_2(%arg0: i32) -> (i32, i32) {
    %c0_i32 = arith.constant 0 : i32
    %c0_i32_0 = arith.constant 0 : i32
    %c0_i32_1 = arith.constant 0 : i32
    return %c0_i32, %c0_i32_0 : i32, i32
  }
  func.func @transform_3(%arg0: i32) -> (i32, i32) {
    %c0_i32 = arith.constant 0 : i32
    %c0_i32_0 = arith.constant 0 : i32
    return %c0_i32, %arg0 : i32, i32
  }
}

module attributes {stable_mosaic.version = 11 : i64} {
  func.func @_var_loss_kernel(%arg0: i32, %arg1: memref<1x128xi32, #tpu.memory_space<vmem>>, %arg2: memref<128x1xi32, #tpu.memory_space<vmem>>, %arg3: memref<128x128xf32, #tpu.memory_space<vmem>>, %arg4: memref<1x8xf32, #tpu.memory_space<vmem>>) attributes {dimension_semantics = [#tpu.dimension_semantics<parallel>], iteration_bounds = array<i64: 1>, scalar_prefetch = 0 : i64, scratch_operands = 0 : i64, tpu.core_type = #tpu.core_type<tc>, window_params = [{pipeline_mode = #tpu.pipeline_mode<synchronous>, transform_indices = @transform_0, window_bounds = array<i64: 1, 128>}, {pipeline_mode = #tpu.pipeline_mode<synchronous>, transform_indices = @transform_1, window_bounds = array<i64: 128, 1>}, {pipeline_mode = #tpu.pipeline_mode<synchronous>, transform_indices = @transform_2, window_bounds = array<i64: 128, 128>}, {transform_indices = @transform_3, window_bounds = array<i64: 1, 8>}]} {
    %c8_i32 = arith.constant 8 : i32
    %0 = arith.muli %arg0, %c8_i32 : i32
    %c0 = arith.constant 0 : index
    %c0_0 = arith.constant 0 : index
    %1 = vector.load %arg1[%c0, %c0_0] : memref<1x128xi32, #tpu.memory_space<vmem>>, vector<1x128xi32>
    %c0_1 = arith.constant 0 : index
    %c0_2 = arith.constant 0 : index
    %2 = vector.load %arg2[%c0_1, %c0_2] : memref<128x1xi32, #tpu.memory_space<vmem>>, vector<128x1xi32>
    %c0_3 = arith.constant 0 : index
    %c0_4 = arith.constant 0 : index
    %3 = vector.load %arg3[%c0_3, %c0_4] : memref<128x128xf32, #tpu.memory_space<vmem>>, vector<128x128xf32>
    %4 = tpu.iota {dimensions = array<i32: 0>} : vector<8x1xi32>
    %5 = vector.broadcast %0 : i32 to vector<8x1xi32>
    %6 = arith.addi %5, %4 : vector<8x1xi32>
    %7 = vector.broadcast %6 : vector<8x1xi32> to vector<8x128xi32>
    %8 = vector.broadcast %1 : vector<1x128xi32> to vector<8x128xi32>
    %9 = arith.cmpi eq, %7, %8 : vector<8x128xi32>
    %10 = arith.extui %9 : vector<8x128xi1> to vector<8x128xi32>
    %11 = arith.sitofp %10 : vector<8x128xi32> to vector<8x128xf32>
    %cst = arith.constant dense<0.000000e+00> : vector<8x128xf32>
    %12 = tpu.matmul %11, %3, %cst {dimension_numbers = #tpu.dot_dimension_numbers<[1], [0], [0], [1], [0, 0, 1, 1], [], []>} : vector<8x128xf32>, vector<128x128xf32>, vector<8x128xf32> -> vector<8x128xf32>
    %13 = arith.mulf %12, %12 : vector<8x128xf32>
    %cst_5 = arith.constant dense<0.000000e+00> : vector<8xf32>
    %14 = vector.multi_reduction <add>, %13, %cst_5 [1] : vector<8x128xf32> to vector<8xf32>
    %15 = vector.shape_cast %14 : vector<8xf32> to vector<8x1xf32>
    %16 = tpu.iota {dimensions = array<i32: 1>} : vector<1x8xi32>
    %17 = vector.broadcast %0 : i32 to vector<1x8xi32>
    %18 = arith.addi %17, %16 : vector<1x8xi32>
    %19 = vector.broadcast %2 : vector<128x1xi32> to vector<128x8xi32>
    %20 = vector.broadcast %18 : vector<1x8xi32> to vector<128x8xi32>
    %21 = arith.cmpi eq, %19, %20 : vector<128x8xi32>
    %22 = arith.extui %21 : vector<128x8xi1> to vector<128x8xi32>
    %23 = arith.sitofp %22 : vector<128x8xi32> to vector<128x8xf32>
    %cst_6 = arith.constant dense<0.000000e+00> : vector<8xf32>
    %24 = vector.multi_reduction <add>, %23, %cst_6 [0] : vector<128x8xf32> to vector<8xf32>
    %25 = vector.shape_cast %24 : vector<8xf32> to vector<1x8xf32>
    %26 = arith.mulf %3, %3 : vector<128x128xf32>
    %cst_7 = arith.constant dense<0.000000e+00> : vector<128xf32>
    %27 = vector.multi_reduction <add>, %26, %cst_7 [1] : vector<128x128xf32> to vector<128xf32>
    %28 = vector.shape_cast %27 : vector<128xf32> to vector<128x1xf32>
    %29 = vector.broadcast %28 : vector<128x1xf32> to vector<128x8xf32>
    %30 = arith.mulf %23, %29 : vector<128x8xf32>
    %cst_8 = arith.constant dense<0.000000e+00> : vector<8xf32>
    %31 = vector.multi_reduction <add>, %30, %cst_8 [0] : vector<128x8xf32> to vector<8xf32>
    %32 = vector.shape_cast %31 : vector<8xf32> to vector<1x8xf32>
    %33 = tpu.iota {dimensions = array<i32: 0>} : vector<8x8xi32>
    %34 = tpu.iota {dimensions = array<i32: 1>} : vector<8x8xi32>
    %35 = arith.cmpi eq, %33, %34 : vector<8x8xi32>
    %cst_9 = arith.constant 0.000000e+00 : f32
    %36 = vector.shape_cast %15 : vector<8x1xf32> to vector<8x1xf32>
    %37 = vector.broadcast %36 : vector<8x1xf32> to vector<8x8xf32>
    %38 = vector.broadcast %cst_9 : f32 to vector<8x8xf32>
    %39 = arith.select %35, %37, %38 : vector<8x8xi1>, vector<8x8xf32>
    %cst_10 = arith.constant dense<0.000000e+00> : vector<8xf32>
    %40 = vector.multi_reduction <add>, %39, %cst_10 [0] : vector<8x8xf32> to vector<8xf32>
    %41 = vector.shape_cast %40 : vector<8xf32> to vector<1x8xf32>
    %cst_11 = arith.constant 1.000000e+00 : f32
    %42 = vector.broadcast %cst_11 : f32 to vector<1x8xf32>
    %43 = arith.maximumf %25, %42 : vector<1x8xf32>
    %cst_12 = arith.constant 1.000000e+00 : f32
    %44 = vector.broadcast %cst_12 : f32 to vector<1x8xf32>
    %45 = arith.divf %44, %43 : vector<1x8xf32>
    %46 = arith.mulf %32, %45 : vector<1x8xf32>
    %47 = arith.mulf %45, %45 : vector<1x8xf32>
    %48 = arith.mulf %41, %47 : vector<1x8xf32>
    %49 = arith.subf %46, %48 : vector<1x8xf32>
    %c0_13 = arith.constant 0 : index
    %c0_14 = arith.constant 0 : index
    %50 = vector.load %arg4[%c0_13, %c0_14] : memref<1x8xf32, #tpu.memory_space<vmem>>, vector<1x8xf32>
    tpu.vector_store %arg4[%c0_13, %c0_14], %49 {strides = array<i32>} : memref<1x8xf32, #tpu.memory_space<vmem>>, vector<1x8xf32>,
    return
  }
  func.func @transform_0(%arg0: i32) -> (i32, i32) {
    %c0_i32 = arith.constant 0 : i32
    %c0_i32_0 = arith.constant 0 : i32
    %c0_i32_1 = arith.constant 0 : i32
    return %c0_i32, %c0_i32_0 : i32, i32
  }
  func.func @transform_1(%arg0: i32) -> (i32, i32) {
    %c0_i32 = arith.constant 0 : i32
    %c0_i32_0 = arith.constant 0 : i32
    %c0_i32_1 = arith.constant 0 : i32
    return %c0_i32, %c0_i32_0 : i32, i32
  }
  func.func @transform_2(%arg0: i32) -> (i32, i32) {
    %c0_i32 = arith.constant 0 : i32
    %c0_i32_0 = arith.constant 0 : i32
    %c0_i32_1 = arith.constant 0 : i32
    return %c0_i32, %c0_i32_0 : i32, i32
  }
  func.func @transform_3(%arg0: i32) -> (i32, i32) {
    %c0_i32 = arith.constant 0 : i32
    %c0_i32_0 = arith.constant 0 : i32
    return %c0_i32, %arg0 : i32, i32
  }
}

</mosaic_0001>

<llo_original>
// kernel: tpu_custom_call.1
$region0: #{tpu_custom_call.1}
  #allocation0 [shape = 'u32[]', space=smem, size = 0x4, offset = 0x4, fixed_abs, tag = 'smem constant byte address 0x4 - core index']
  #allocation1 [shape = 'u32[144,128]{1,0:T(1,128)}', space=vmem, size = 0x12000, scoped, tag = 'internal scratch']
  %s0 = inlined_call_operand.vmem [shape: s32[1,128], index: 0, kind: input, shape index: {}]
  %s1 = inlined_call_operand.vmem [shape: s32[128,1], index: 1, kind: input, shape index: {}]
  %s2 = inlined_call_operand.vmem [shape: f32[128,128], index: 2, kind: input, shape index: {}]
  %s3 = inlined_call_operand.hbm [shape: f32[1,8], index: 3, kind: output, shape index: {}]
  %s4 = sld [smem:[#allocation0]]
  $region22: #{tpu_custom_call.1} parent=0
    _
  %s6 = ssub.s32 1, %s4
  %s7 = scalar_select 0, %s6, %s4
  $region1: #{tpu_custom_call.1} parent=0
    #allocation2 [shape = 'u8[512]{0}', space=vmem, size = 0x400, scoped, tag = 'output window, operand 0, single buffered']
    #allocation3 [shape = 's32[1]{0}', space=sflag, size = 0x4, scoped, tag = 'scoped memory for tpu_custom_call.1']
    %8 = vsyncpa [#allocation3], 0
    // Predicated region
    $region2: #{tpu_custom_call.1} parent=1 // pred_check
      _
    $region3: #{tpu_custom_call.1} parent=1 // pred_check_branch
      %10 = sbr.rel (0) target = $region5
    $region4: #{tpu_custom_call.1} parent=1 // pred_region
      _
    $region5: #{tpu_custom_call.1} parent=1 // pred_fallthru
      _
    // Predicated region
    $region6: #{tpu_custom_call.1} parent=1 // pred_check
      _
    $region7: #{tpu_custom_call.1} parent=1 // pred_check_branch
      %12 = sbr.rel (0) target = $region9
    $region8: #{tpu_custom_call.1} parent=1 // pred_region
      _
    $region9: #{tpu_custom_call.1} parent=1 // pred_fallthru
      _
    // Predicated region
    $region10: #{tpu_custom_call.1} parent=1 // pred_check
      _
    $region11: #{tpu_custom_call.1} parent=1 // pred_check_branch
      %14 = sbr.rel (0) target = $region13
    $region12: #{tpu_custom_call.1} parent=1 // pred_region
      _
    $region13: #{tpu_custom_call.1} parent=1 // pred_fallthru
      _
    %s15 = smul.u32 0, 8
    %v16 = vld [vmem:[%s0] sm:$0x1]
    %v17 = vld [vmem:[%s1] sm:$0xff]
    %v18 = vld [vmem:[%s1 + $0x8] sm:$0xff]
    %v19 = vld [vmem:[%s1 + $0x10] sm:$0xff]
    %v20 = vld [vmem:[%s1 + $0x18] sm:$0xff]
    %v21 = vld [vmem:[%s1 + $0x20] sm:$0xff]
    %v22 = vld [vmem:[%s1 + $0x28] sm:$0xff]
    %v23 = vld [vmem:[%s1 + $0x30] sm:$0xff]
    %v24 = vld [vmem:[%s1 + $0x38] sm:$0xff]
    %v25 = vld [vmem:[%s1 + $0x40] sm:$0xff]
    %v26 = vld [vmem:[%s1 + $0x48] sm:$0xff]
    %v27 = vld [vmem:[%s1 + $0x50] sm:$0xff]
    %v28 = vld [vmem:[%s1 + $0x58] sm:$0xff]
    %v29 = vld [vmem:[%s1 + $0x60] sm:$0xff]
    %v30 = vld [vmem:[%s1 + $0x68] sm:$0xff]
    %v31 = vld [vmem:[%s1 + $0x70] sm:$0xff]
    %v32 = vld [vmem:[%s1 + $0x78] sm:$0xff]
    %v33 = vld [vmem:[%s2] sm:$0xff]
    %v34 = vld [vmem:[%s2 + $0x8] sm:$0xff]
    %v35 = vld [vmem:[%s2 + $0x10] sm:$0xff]
    %v36 = vld [vmem:[%s2 + $0x18] sm:$0xff]
    %v37 = vld [vmem:[%s2 + $0x20] sm:$0xff]
    %v38 = vld [vmem:[%s2 + $0x28] sm:$0xff]
    %v39 = vld [vmem:[%s2 + $0x30] sm:$0xff]
    %v40 = vld [vmem:[%s2 + $0x38] sm:$0xff]
    %v41 = vld [vmem:[%s2 + $0x40] sm:$0xff]
    %v42 = vld [vmem:[%s2 + $0x48] sm:$0xff]
    %v43 = vld [vmem:[%s2 + $0x50] sm:$0xff]
    %v44 = vld [vmem:[%s2 + $0x58] sm:$0xff]
    %v45 = vld [vmem:[%s2 + $0x60] sm:$0xff]
    %v46 = vld [vmem:[%s2 + $0x68] sm:$0xff]
    %v47 = vld [vmem:[%s2 + $0x70] sm:$0xff]
    %v48 = vld [vmem:[%s2 + $0x78] sm:$0xff]
    %v49 = vlaneseq
    %v50 = vshrl.u32 %v49, 7
    %v51 = vstv %s15
    %v52 = vadd.s32 %v51, %v50
    %v53 = vlaneseq
    %v54 = vshrl.u32 %v53, 7
    %v55 = vsub.s32 0, %v54
    %v56 = vrot.slane %v16, %v55
    %vm57 = vcmp.eq.s32.totalorder %v52, %v56
    %v58 = vsel %vm57, 1, 0
    %v59 = vcvt.s32.f32 %v58
    %60 = vmatprep.subr.mxu0 0.0
    %61 = vmatpush1.msra.mxu0 %v48
    %62 = vmatprep.subr.mxu0 0.0
    %63 = vmatpush1.msra.mxu0 %v47
    %64 = vmatprep.subr.mxu0 0.0
    %65 = vmatpush1.msra.mxu0 %v46
    %66 = vmatprep.subr.mxu0 0.0
    %67 = vmatpush1.msra.mxu0 %v45
    %68 = vmatprep.subr.mxu0 0.0
    %69 = vmatpush1.msra.mxu0 %v44
    %70 = vmatprep.subr.mxu0 0.0
    %71 = vmatpush1.msra.mxu0 %v43
    %72 = vmatprep.subr.mxu0 0.0
    %73 = vmatpush1.msra.mxu0 %v42
    %74 = vmatprep.subr.mxu0 0.0
    %75 = vmatpush1.msra.mxu0 %v41
    %76 = vmatprep.subr.mxu0 0.0
    %77 = vmatpush1.msra.mxu0 %v40
    %78 = vmatprep.subr.mxu0 0.0
    %79 = vmatpush1.msra.mxu0 %v39
    %80 = vmatprep.subr.mxu0 0.0
    %81 = vmatpush1.msra.mxu0 %v38
    %82 = vmatprep.subr.mxu0 0.0
    %83 = vmatpush1.msra.mxu0 %v37
    %84 = vmatprep.subr.mxu0 0.0
    %85 = vmatpush1.msra.mxu0 %v36
    %86 = vmatprep.subr.mxu0 0.0
    %87 = vmatpush1.msra.mxu0 %v35
    %88 = vmatprep.subr.mxu0 0.0
    %89 = vmatpush1.msra.mxu0 %v34
    %90 = vmatprep.subr.mxu0 0.0
    %91 = vmatpush1.msra.mxu0 %v33
    %92 = vmatprep.subr.mxu0 0.0
    %93 = vmatpush2.msra.mxu0 0.0
    %94 = vmatprep.subr.mxu0 0.0
    %95 = vmatpush2.msra.mxu0 0.0
    %96 = vmatprep.subr.mxu0 0.0
    %97 = vmatpush2.msra.mxu0 0.0
    %98 = vmatprep.subr.mxu0 0.0
    %99 = vmatpush2.msra.mxu0 0.0
    %100 = vmatprep.subr.mxu0 0.0
    %101 = vmatpush2.msra.mxu0 0.0
    %102 = vmatprep.subr.mxu0 0.0
    %103 = vmatpush2.msra.mxu0 0.0
    %104 = vmatprep.subr.mxu0 0.0
    %105 = vmatpush2.msra.mxu0 0.0
    %106 = vmatprep.subr.mxu0 0.0
    %107 = vmatpush2.msra.mxu0 0.0
    %108 = vmatprep.subr.mxu0 0.0
    %109 = vmatpush2.msra.mxu0 0.0
    %110 = vmatprep.subr.mxu0 0.0
    %111 = vmatpush2.msra.mxu0 0.0
    %112 = vmatprep.subr.mxu0 0.0
    %113 = vmatpush2.msra.mxu0 0.0
    %114 = vmatprep.subr.mxu0 0.0
    %115 = vmatpush2.msra.mxu0 0.0
    %116 = vmatprep.subr.mxu0 0.0
    %117 = vmatpush2.msra.mxu0 0.0
    %118 = vmatprep.subr.mxu0 0.0
    %119 = vmatpush2.msra.mxu0 0.0
    %120 = vmatprep.subr.mxu0 0.0
    %121 = vmatpush2.msra.mxu0 0.0
    %122 = vmatprep.subr.mxu0 0.0
    %123 = vmatpush2.msra.mxu0 0.0
    %124 = vmatprep.mubr.f32.mxu0 0.0
    %125 = vmatmul.mubr.f32.gmra.mxu0 %v59
    %v126 = vpop.f32.mrf.mxu0
    %v127 = vadd.f32 0.0, %v126
    %v128 = vpop.f32.mrf.mxu0
    %129 = vdwg.mxu0
    %v130 = vmul.f32 %v127, %v127
    %131 = vadd.xlane.f32.xlu0 %v130
    %v132 = vpop.xlane.xlu0 %131
    %v133 = vlaneseq
    %v134 = vand.u32 %v133, 127
    %v135 = vadd.s32 %v51, %v134
    %136 = vset.pattern.permute.xlu0 0
    %137 = vperm.xlu0 %136, %v17
    %v138 = vpop.permute.xlu0 %137
    %139 = vset.pattern.permute.xlu0 0
    %140 = vperm.xlu0 %139, %v18
    %v141 = vpop.permute.xlu0 %140
    %142 = vset.pattern.permute.xlu0 0
    %143 = vperm.xlu0 %142, %v19
    %v144 = vpop.permute.xlu0 %143
    %145 = vset.pattern.permute.xlu0 0
    %146 = vperm.xlu0 %145, %v20
    %v147 = vpop.permute.xlu0 %146
    %148 = vset.pattern.permute.xlu0 0
    %149 = vperm.xlu0 %148, %v21
    %v150 = vpop.permute.xlu0 %149
    %151 = vset.pattern.permute.xlu0 0
    %152 = vperm.xlu0 %151, %v22
    %v153 = vpop.permute.xlu0 %152
    %154 = vset.pattern.permute.xlu0 0
    %155 = vperm.xlu0 %154, %v23
    %v156 = vpop.permute.xlu0 %155
    %157 = vset.pattern.permute.xlu0 0
    %158 = vperm.xlu0 %157, %v24
    %v159 = vpop.permute.xlu0 %158
    %160 = vset.pattern.permute.xlu0 0
    %161 = vperm.xlu0 %160, %v25
    %v162 = vpop.permute.xlu0 %161
    %163 = vset.pattern.permute.xlu0 0
    %164 = vperm.xlu0 %163, %v26
    %v165 = vpop.permute.xlu0 %164
    %166 = vset.pattern.permute.xlu0 0
    %167 = vperm.xlu0 %166, %v27
    %v168 = vpop.permute.xlu0 %167
    %169 = vset.pattern.permute.xlu0 0
    %170 = vperm.xlu0 %169, %v28
    %v171 = vpop.permute.xlu0 %170
    %172 = vset.pattern.permute.xlu0 0
    %173 = vperm.xlu0 %172, %v29
    %v174 = vpop.permute.xlu0 %173
    %175 = vset.pattern.permute.xlu0 0
    %176 = vperm.xlu0 %175, %v30
    %v177 = vpop.permute.xlu0 %176
    %178 = vset.pattern.permute.xlu0 0
    %179 = vperm.xlu0 %178, %v31
    %v180 = vpop.permute.xlu0 %179
    %181 = vset.pattern.permute.xlu0 0
    %182 = vperm.xlu0 %181, %v32
    %v183 = vpop.permute.xlu0 %182
    %vm184 = vcmp.eq.s32.totalorder %v138, %v135
    %vm185 = vcmp.eq.s32.totalorder %v141, %v135
    %vm186 = vcmp.eq.s32.totalorder %v144, %v135
    %vm187 = vcmp.eq.s32.totalorder %v147, %v135
    %vm188 = vcmp.eq.s32.totalorder %v150, %v135
    %vm189 = vcmp.eq.s32.totalorder %v153, %v135
    %vm190 = vcmp.eq.s32.totalorder %v156, %v135
    %vm191 = vcmp.eq.s32.totalorder %v159, %v135
    %vm192 = vcmp.eq.s32.totalorder %v162, %v135
    %vm193 = vcmp.eq.s32.totalorder %v165, %v135
    %vm194 = vcmp.eq.s32.totalorder %v168, %v135
    %vm195 = vcmp.eq.s32.totalorder %v171, %v135
    %vm196 = vcmp.eq.s32.totalorder %v174, %v135
    %vm197 = vcmp.eq.s32.totalorder %v177, %v135
    %vm198 = vcmp.eq.s32.totalorder %v180, %v135
    %vm199 = vcmp.eq.s32.totalorder %v183, %v135
    %v200 = vsel %vm184, 1, 0
    %v201 = vsel %vm185, 1, 0
    %v202 = vsel %vm186, 1, 0
    %v203 = vsel %vm187, 1, 0
    %v204 = vsel %vm188, 1, 0
    %v205 = vsel %vm189, 1, 0
    %v206 = vsel %vm190, 1, 0
    %v207 = vsel %vm191, 1, 0
    %v208 = vsel %vm192, 1, 0
    %v209 = vsel %vm193, 1, 0
    %v210 = vsel %vm194, 1, 0
    %v211 = vsel %vm195, 1, 0
    %v212 = vsel %vm196, 1, 0
    %v213 = vsel %vm197, 1, 0
    %v214 = vsel %vm198, 1, 0
    %v215 = vsel %vm199, 1, 0
    %v216 = vcvt.s32.f32 %v200
    %v217 = vcvt.s32.f32 %v201
    %v218 = vcvt.s32.f32 %v202
    %v219 = vcvt.s32.f32 %v203
    %v220 = vcvt.s32.f32 %v204
    %v221 = vcvt.s32.f32 %v205
    %v222 = vcvt.s32.f32 %v206
    %v223 = vcvt.s32.f32 %v207
    %v224 = vcvt.s32.f32 %v208
    %v225 = vcvt.s32.f32 %v209
    %v226 = vcvt.s32.f32 %v210
    %v227 = vcvt.s32.f32 %v211
    %v228 = vcvt.s32.f32 %v212
    %v229 = vcvt.s32.f32 %v213
    %v230 = vcvt.s32.f32 %v214
    %v231 = vcvt.s32.f32 %v215
    %vm232 = vcmask 64512
    %v233 = vsel %vm232, %v216, 0.0
    %v234 = vsel %vm232, %v217, 0.0
    %v235 = vadd.f32 %v233, %v234
    %v236 = vsel %vm232, %v218, 0.0
    %v237 = vadd.f32 %v235, %v236
    %v238 = vsel %vm232, %v219, 0.0
    %v239 = vadd.f32 %v237, %v238
    %v240 = vsel %vm232, %v220, 0.0
    %v241 = vadd.f32 %v239, %v240
    %v242 = vsel %vm232, %v221, 0.0
    %v243 = vadd.f32 %v241, %v242
    %v244 = vsel %vm232, %v222, 0.0
    %v245 = vadd.f32 %v243, %v244
    %v246 = vsel %vm232, %v223, 0.0
    %v247 = vadd.f32 %v245, %v246
    %v248 = vsel %vm232, %v224, 0.0
    %v249 = vadd.f32 %v247, %v248
    %v250 = vsel %vm232, %v225, 0.0
    %v251 = vadd.f32 %v249, %v250
    %v252 = vsel %vm232, %v226, 0.0
    %v253 = vadd.f32 %v251, %v252
    %v254 = vsel %vm232, %v227, 0.0
    %v255 = vadd.f32 %v253, %v254
    %v256 = vsel %vm232, %v228, 0.0
    %v257 = vadd.f32 %v255, %v256
    %v258 = vsel %vm232, %v229, 0.0
    %v259 = vadd.f32 %v257, %v258
    %v260 = vsel %vm232, %v230, 0.0
    %v261 = vadd.f32 %v259, %v260
    %v262 = vsel %vm232, %v231, 0.0
    %v263 = vadd.f32 %v261, %v262
    %v264 = vrot.slane %v263, 4
    %v265 = vadd.f32 %v263, %v264
    %v266 = vrot.slane %v265, 2
    %v267 = vadd.f32 %v265, %v266
    %v268 = vrot.slane %v267, 1
    %v269 = vadd.f32 %v267, %v268
    %v270 = vmul.f32 %v33, %v33
    %v271 = vmul.f32 %v34, %v34
    %v272 = vmul.f32 %v35, %v35
    %v273 = vmul.f32 %v36, %v36
    %v274 = vmul.f32 %v37, %v37
    %v275 = vmul.f32 %v38, %v38
    %v276 = vmul.f32 %v39, %v39
    %v277 = vmul.f32 %v40, %v40
    %v278 = vmul.f32 %v41, %v41
    %v279 = vmul.f32 %v42, %v42
    %v280 = vmul.f32 %v43, %v43
    %v281 = vmul.f32 %v44, %v44
    %v282 = vmul.f32 %v45, %v45
    %v283 = vmul.f32 %v46, %v46
    %v284 = vmul.f32 %v47, %v47
    %v285 = vmul.f32 %v48, %v48
    %286 = vadd.xlane.f32.xlu0 %v270
    %v287 = vpop.xlane.xlu0 %286
    %288 = vadd.xlane.f32.xlu0 %v271
    %v289 = vpop.xlane.xlu0 %288
    %290 = vadd.xlane.f32.xlu0 %v272
    %v291 = vpop.xlane.xlu0 %290
    %292 = vadd.xlane.f32.xlu0 %v273
    %v293 = vpop.xlane.xlu0 %292
    %294 = vadd.xlane.f32.xlu0 %v274
    %v295 = vpop.xlane.xlu0 %294
    %296 = vadd.xlane.f32.xlu0 %v275
    %v297 = vpop.xlane.xlu0 %296
    %298 = vadd.xlane.f32.xlu0 %v276
    %v299 = vpop.xlane.xlu0 %298
    %300 = vadd.xlane.f32.xlu0 %v277
    %v301 = vpop.xlane.xlu0 %300
    %302 = vadd.xlane.f32.xlu0 %v278
    %v303 = vpop.xlane.xlu0 %302
    %304 = vadd.xlane.f32.xlu0 %v279
    %v305 = vpop.xlane.xlu0 %304
    %306 = vadd.xlane.f32.xlu0 %v280
    %v307 = vpop.xlane.xlu0 %306
    %308 = vadd.xlane.f32.xlu0 %v281
    %v309 = vpop.xlane.xlu0 %308
    %310 = vadd.xlane.f32.xlu0 %v282
    %v311 = vpop.xlane.xlu0 %310
    %312 = vadd.xlane.f32.xlu0 %v283
    %v313 = vpop.xlane.xlu0 %312
    %314 = vadd.xlane.f32.xlu0 %v284
    %v315 = vpop.xlane.xlu0 %314
    %316 = vadd.xlane.f32.xlu0 %v285
    %v317 = vpop.xlane.xlu0 %316
    %v318 = vmul.f32 %v216, %v287
    %v319 = vmul.f32 %v217, %v289
    %v320 = vmul.f32 %v218, %v291
    %v321 = vmul.f32 %v219, %v293
    %v322 = vmul.f32 %v220, %v295
    %v323 = vmul.f32 %v221, %v297
    %v324 = vmul.f32 %v222, %v299
    %v325 = vmul.f32 %v223, %v301
    %v326 = vmul.f32 %v224, %v303
    %v327 = vmul.f32 %v225, %v305
    %v328 = vmul.f32 %v226, %v307
    %v329 = vmul.f32 %v227, %v309
    %v330 = vmul.f32 %v228, %v311
    %v331 = vmul.f32 %v229, %v313
    %v332 = vmul.f32 %v230, %v315
    %v333 = vmul.f32 %v231, %v317
    %v334 = vsel %vm232, %v318, 0.0
    %v335 = vsel %vm232, %v319, 0.0
    %v336 = vadd.f32 %v334, %v335
    %v337 = vsel %vm232, %v320, 0.0
    %v338 = vadd.f32 %v336, %v337
    %v339 = vsel %vm232, %v321, 0.0
    %v340 = vadd.f32 %v338, %v339
    %v341 = vsel %vm232, %v322, 0.0
    %v342 = vadd.f32 %v340, %v341
    %v343 = vsel %vm232, %v323, 0.0
    %v344 = vadd.f32 %v342, %v343
    %v345 = vsel %vm232, %v324, 0.0
    %v346 = vadd.f32 %v344, %v345
    %v347 = vsel %vm232, %v325, 0.0
    %v348 = vadd.f32 %v346, %v347
    %v349 = vsel %vm232, %v326, 0.0
    %v350 = vadd.f32 %v348, %v349
    %v351 = vsel %vm232, %v327, 0.0
    %v352 = vadd.f32 %v350, %v351
    %v353 = vsel %vm232, %v328, 0.0
    %v354 = vadd.f32 %v352, %v353
    %v355 = vsel %vm232, %v329, 0.0
    %v356 = vadd.f32 %v354, %v355
    %v357 = vsel %vm232, %v330, 0.0
    %v358 = vadd.f32 %v356, %v357
    %v359 = vsel %vm232, %v331, 0.0
    %v360 = vadd.f32 %v358, %v359
    %v361 = vsel %vm232, %v332, 0.0
    %v362 = vadd.f32 %v360, %v361
    %v363 = vsel %vm232, %v333, 0.0
    %v364 = vadd.f32 %v362, %v363
    %v365 = vrot.slane %v364, 4
    %v366 = vadd.f32 %v364, %v365
    %v367 = vrot.slane %v366, 2
    %v368 = vadd.f32 %v366, %v367
    %v369 = vrot.slane %v368, 1
    %v370 = vadd.f32 %v368, %v369
    %vm371 = vcmp.eq.s32.totalorder %v50, %v134
    %v372 = vsel %vm371, %v132, 0.0
    %v373 = vsel %vm232, %v372, 0.0
    %v374 = vrot.slane %v373, 4
    %v375 = vadd.f32 %v373, %v374
    %v376 = vrot.slane %v375, 2
    %v377 = vadd.f32 %v375, %v376
    %v378 = vrot.slane %v377, 1
    %v379 = vadd.f32 %v377, %v378
    %v380 = vmax.f32 %v269, 1.0
    %v381 = vrcp.pop %v380
    %v382 = vmul.f32 1.0, %v381
    %v383 = vmul.f32 %v370, %v382
    %v384 = vmul.f32 %v382, %v382
    %v385 = vmul.f32 %v379, %v384
    %v386 = vsub.f32 %v383, %v385
    %vm387 = vcmask 57344
    %388 = vst.msk [vmem:[#allocation2] sm:$0x1] %vm387, %v386
    // Predicated region
    $region14: #{tpu_custom_call.1} parent=1 // pred_check
      _
    $region15: #{tpu_custom_call.1} parent=1 // pred_check_branch
      %390 = sbr.rel (0) target = $region17
    $region16: #{tpu_custom_call.1} parent=1 // pred_region
      %s392 = ssub.s32 16, 16
      %393 = vsyncadd [#allocation3], %s392
      %s395 = sshll.u32 [#allocation2], 4
      %s396 = int_to_ptr.vmem [resolvable:$true] %s395
      %398 = dma.vmem_to_hbm [thread:$0]  %s396, 16, %s3, [#allocation3]
    $region17: #{tpu_custom_call.1} parent=1 // pred_fallthru
      _
    // Predicated region
    $region18: #{tpu_custom_call.1} parent=1 // pred_check
      _
    $region19: #{tpu_custom_call.1} parent=1 // pred_check_branch
      %400 = sbr.rel (0) target = $region21
    $region20: #{tpu_custom_call.1} parent=1 // pred_region
      %401 = dma.done [#allocation3], 16
    $region21: #{tpu_custom_call.1} parent=1 // pred_fallthru
      _
    %402 = vsyncpa [#allocation3], 1

// kernel: tpu_custom_call.1
$region0: #{tpu_custom_call.1}
  #allocation0 [shape = 'u32[]', space=smem, size = 0x4, offset = 0x4, fixed_abs, tag = 'smem constant byte address 0x4 - core index']
  #allocation1 [shape = 'u32[144,128]{1,0:T(1,128)}', space=vmem, size = 0x12000, scoped, tag = 'internal scratch']
  %s0 = inlined_call_operand.vmem [shape: s32[1,128], index: 0, kind: input, shape index: {}]
  %s1 = inlined_call_operand.vmem [shape: s32[128,1], index: 1, kind: input, shape index: {}]
  %s2 = inlined_call_operand.vmem [shape: f32[128,128], index: 2, kind: input, shape index: {}]
  %s3 = inlined_call_operand.hbm [shape: f32[1,8], index: 3, kind: output, shape index: {}]
  %s4 = sld [smem:[#allocation0]]
  $region22: #{tpu_custom_call.1} parent=0
    _
  %s6 = ssub.s32 1, %s4
  %s7 = scalar_select 0, %s6, %s4
  $region1: #{tpu_custom_call.1} parent=0
    #allocation2 [shape = 'u8[512]{0}', space=vmem, size = 0x400, scoped, tag = 'output window, operand 0, single buffered']
    #allocation3 [shape = 's32[1]{0}', space=sflag, size = 0x4, scoped, tag = 'scoped memory for tpu_custom_call.1']
    %8 = vsyncpa [#allocation3], 0
    // Predicated region
    $region2: #{tpu_custom_call.1} parent=1 // pred_check
      _
    $region3: #{tpu_custom_call.1} parent=1 // pred_check_branch
      %10 = sbr.rel (0) target = $region5
    $region4: #{tpu_custom_call.1} parent=1 // pred_region
      _
    $region5: #{tpu_custom_call.1} parent=1 // pred_fallthru
      _
    // Predicated region
    $region6: #{tpu_custom_call.1} parent=1 // pred_check
      _
    $region7: #{tpu_custom_call.1} parent=1 // pred_check_branch
      %12 = sbr.rel (0) target = $region9
    $region8: #{tpu_custom_call.1} parent=1 // pred_region
      _
    $region9: #{tpu_custom_call.1} parent=1 // pred_fallthru
      _
    // Predicated region
    $region10: #{tpu_custom_call.1} parent=1 // pred_check
      _
    $region11: #{tpu_custom_call.1} parent=1 // pred_check_branch
      %14 = sbr.rel (0) target = $region13
    $region12: #{tpu_custom_call.1} parent=1 // pred_region
      _
    $region13: #{tpu_custom_call.1} parent=1 // pred_fallthru
      _
    %s15 = smul.u32 0, 8
    %v16 = vld [vmem:[%s0] sm:$0x1]
    %v17 = vld [vmem:[%s1] sm:$0xff]
    %v18 = vld [vmem:[%s1 + $0x8] sm:$0xff]
    %v19 = vld [vmem:[%s1 + $0x10] sm:$0xff]
    %v20 = vld [vmem:[%s1 + $0x18] sm:$0xff]
    %v21 = vld [vmem:[%s1 + $0x20] sm:$0xff]
    %v22 = vld [vmem:[%s1 + $0x28] sm:$0xff]
    %v23 = vld [vmem:[%s1 + $0x30] sm:$0xff]
    %v24 = vld [vmem:[%s1 + $0x38] sm:$0xff]
    %v25 = vld [vmem:[%s1 + $0x40] sm:$0xff]
    %v26 = vld [vmem:[%s1 + $0x48] sm:$0xff]
    %v27 = vld [vmem:[%s1 + $0x50] sm:$0xff]
    %v28 = vld [vmem:[%s1 + $0x58] sm:$0xff]
    %v29 = vld [vmem:[%s1 + $0x60] sm:$0xff]
    %v30 = vld [vmem:[%s1 + $0x68] sm:$0xff]
    %v31 = vld [vmem:[%s1 + $0x70] sm:$0xff]
    %v32 = vld [vmem:[%s1 + $0x78] sm:$0xff]
    %v33 = vld [vmem:[%s2] sm:$0xff]
    %v34 = vld [vmem:[%s2 + $0x8] sm:$0xff]
    %v35 = vld [vmem:[%s2 + $0x10] sm:$0xff]
    %v36 = vld [vmem:[%s2 + $0x18] sm:$0xff]
    %v37 = vld [vmem:[%s2 + $0x20] sm:$0xff]
    %v38 = vld [vmem:[%s2 + $0x28] sm:$0xff]
    %v39 = vld [vmem:[%s2 + $0x30] sm:$0xff]
    %v40 = vld [vmem:[%s2 + $0x38] sm:$0xff]
    %v41 = vld [vmem:[%s2 + $0x40] sm:$0xff]
    %v42 = vld [vmem:[%s2 + $0x48] sm:$0xff]
    %v43 = vld [vmem:[%s2 + $0x50] sm:$0xff]
    %v44 = vld [vmem:[%s2 + $0x58] sm:$0xff]
    %v45 = vld [vmem:[%s2 + $0x60] sm:$0xff]
    %v46 = vld [vmem:[%s2 + $0x68] sm:$0xff]
    %v47 = vld [vmem:[%s2 + $0x70] sm:$0xff]
    %v48 = vld [vmem:[%s2 + $0x78] sm:$0xff]
    %v49 = vlaneseq
    %v50 = vshrl.u32 %v49, 7
    %v51 = vstv %s15
    %v52 = vadd.s32 %v51, %v50
    %v53 = vlaneseq
    %v54 = vshrl.u32 %v53, 7
    %v55 = vsub.s32 0, %v54
    %v56 = vrot.slane %v16, %v55
    %vm57 = vcmp.eq.s32.totalorder %v52, %v56
    %v58 = vsel %vm57, 1, 0
    %v59 = vcvt.s32.f32 %v58
    %60 = vmatprep.subr.mxu0 0.0
    %61 = vmatpush1.msra.mxu0 %v48
    %62 = vmatprep.subr.mxu0 0.0
    %63 = vmatpush1.msra.mxu0 %v47
    %64 = vmatprep.subr.mxu0 0.0
    %65 = vmatpush1.msra.mxu0 %v46
    %66 = vmatprep.subr.mxu0 0.0
    %67 = vmatpush1.msra.mxu0 %v45
    %68 = vmatprep.subr.mxu0 0.0
    %69 = vmatpush1.msra.mxu0 %v44
    %70 = vmatprep.subr.mxu0 0.0
    %71 = vmatpush1.msra.mxu0 %v43
    %72 = vmatprep.subr.mxu0 0.0
    %73 = vmatpush1.msra.mxu0 %v42
    %74 = vmatprep.subr.mxu0 0.0
    %75 = vmatpush1.msra.mxu0 %v41
    %76 = vmatprep.subr.mxu0 0.0
    %77 = vmatpush1.msra.mxu0 %v40
    %78 = vmatprep.subr.mxu0 0.0
    %79 = vmatpush1.msra.mxu0 %v39
    %80 = vmatprep.subr.mxu0 0.0
    %81 = vmatpush1.msra.mxu0 %v38
    %82 = vmatprep.subr.mxu0 0.0
    %83 = vmatpush1.msra.mxu0 %v37
    %84 = vmatprep.subr.mxu0 0.0
    %85 = vmatpush1.msra.mxu0 %v36
    %86 = vmatprep.subr.mxu0 0.0
    %87 = vmatpush1.msra.mxu0 %v35
    %88 = vmatprep.subr.mxu0 0.0
    %89 = vmatpush1.msra.mxu0 %v34
    %90 = vmatprep.subr.mxu0 0.0
    %91 = vmatpush1.msra.mxu0 %v33
    %92 = vmatprep.subr.mxu0 0.0
    %93 = vmatpush2.msra.mxu0 0.0
    %94 = vmatprep.subr.mxu0 0.0
    %95 = vmatpush2.msra.mxu0 0.0
    %96 = vmatprep.subr.mxu0 0.0
    %97 = vmatpush2.msra.mxu0 0.0
    %98 = vmatprep.subr.mxu0 0.0
    %99 = vmatpush2.msra.mxu0 0.0
    %100 = vmatprep.subr.mxu0 0.0
    %101 = vmatpush2.msra.mxu0 0.0
    %102 = vmatprep.subr.mxu0 0.0
    %103 = vmatpush2.msra.mxu0 0.0
    %104 = vmatprep.subr.mxu0 0.0
    %105 = vmatpush2.msra.mxu0 0.0
    %106 = vmatprep.subr.mxu0 0.0
    %107 = vmatpush2.msra.mxu0 0.0
    %108 = vmatprep.subr.mxu0 0.0
    %109 = vmatpush2.msra.mxu0 0.0
    %110 = vmatprep.subr.mxu0 0.0
    %111 = vmatpush2.msra.mxu0 0.0
    %112 = vmatprep.subr.mxu0 0.0
    %113 = vmatpush2.msra.mxu0 0.0
    %114 = vmatprep.subr.mxu0 0.0
    %115 = vmatpush2.msra.mxu0 0.0
    %116 = vmatprep.subr.mxu0 0.0
    %117 = vmatpush2.msra.mxu0 0.0
    %118 = vmatprep.subr.mxu0 0.0
    %119 = vmatpush2.msra.mxu0 0.0
    %120 = vmatprep.subr.mxu0 0.0
    %121 = vmatpush2.msra.mxu0 0.0
    %122 = vmatprep.subr.mxu0 0.0
    %123 = vmatpush2.msra.mxu0 0.0
    %124 = vmatprep.mubr.f32.mxu0 0.0
    %125 = vmatmul.mubr.f32.gmra.mxu0 %v59
    %v126 = vpop.f32.mrf.mxu0
    %v127 = vadd.f32 0.0, %v126
    %v128 = vpop.f32.mrf.mxu0
    %129 = vdwg.mxu0
    %v130 = vmul.f32 %v127, %v127
    %131 = vadd.xlane.f32.xlu0 %v130
    %v132 = vpop.xlane.xlu0 %131
    %v133 = vlaneseq
    %v134 = vand.u32 %v133, 127
    %v135 = vadd.s32 %v51, %v134
    %136 = vset.pattern.permute.xlu0 0
    %137 = vperm.xlu0 %136, %v17
    %v138 = vpop.permute.xlu0 %137
    %139 = vset.pattern.permute.xlu0 0
    %140 = vperm.xlu0 %139, %v18
    %v141 = vpop.permute.xlu0 %140
    %142 = vset.pattern.permute.xlu0 0
    %143 = vperm.xlu0 %142, %v19
    %v144 = vpop.permute.xlu0 %143
    %145 = vset.pattern.permute.xlu0 0
    %146 = vperm.xlu0 %145, %v20
    %v147 = vpop.permute.xlu0 %146
    %148 = vset.pattern.permute.xlu0 0
    %149 = vperm.xlu0 %148, %v21
    %v150 = vpop.permute.xlu0 %149
    %151 = vset.pattern.permute.xlu0 0
    %152 = vperm.xlu0 %151, %v22
    %v153 = vpop.permute.xlu0 %152
    %154 = vset.pattern.permute.xlu0 0
    %155 = vperm.xlu0 %154, %v23
    %v156 = vpop.permute.xlu0 %155
    %157 = vset.pattern.permute.xlu0 0
    %158 = vperm.xlu0 %157, %v24
    %v159 = vpop.permute.xlu0 %158
    %160 = vset.pattern.permute.xlu0 0
    %161 = vperm.xlu0 %160, %v25
    %v162 = vpop.permute.xlu0 %161
    %163 = vset.pattern.permute.xlu0 0
    %164 = vperm.xlu0 %163, %v26
    %v165 = vpop.permute.xlu0 %164
    %166 = vset.pattern.permute.xlu0 0
    %167 = vperm.xlu0 %166, %v27
    %v168 = vpop.permute.xlu0 %167
    %169 = vset.pattern.permute.xlu0 0
    %170 = vperm.xlu0 %169, %v28
    %v171 = vpop.permute.xlu0 %170
    %172 = vset.pattern.permute.xlu0 0
    %173 = vperm.xlu0 %172, %v29
    %v174 = vpop.permute.xlu0 %173
    %175 = vset.pattern.permute.xlu0 0
    %176 = vperm.xlu0 %175, %v30
    %v177 = vpop.permute.xlu0 %176
    %178 = vset.pattern.permute.xlu0 0
    %179 = vperm.xlu0 %178, %v31
    %v180 = vpop.permute.xlu0 %179
    %181 = vset.pattern.permute.xlu0 0
    %182 = vperm.xlu0 %181, %v32
    %v183 = vpop.permute.xlu0 %182
    %vm184 = vcmp.eq.s32.totalorder %v138, %v135
    %vm185 = vcmp.eq.s32.totalorder %v141, %v135
    %vm186 = vcmp.eq.s32.totalorder %v144, %v135
    %vm187 = vcmp.eq.s32.totalorder %v147, %v135
    %vm188 = vcmp.eq.s32.totalorder %v150, %v135
    %vm189 = vcmp.eq.s32.totalorder %v153, %v135
    %vm190 = vcmp.eq.s32.totalorder %v156, %v135
    %vm191 = vcmp.eq.s32.totalorder %v159, %v135
    %vm192 = vcmp.eq.s32.totalorder %v162, %v135
    %vm193 = vcmp.eq.s32.totalorder %v165, %v135
    %vm194 = vcmp.eq.s32.totalorder %v168, %v135
    %vm195 = vcmp.eq.s32.totalorder %v171, %v135
    %vm196 = vcmp.eq.s32.totalorder %v174, %v135
    %vm197 = vcmp.eq.s32.totalorder %v177, %v135
    %vm198 = vcmp.eq.s32.totalorder %v180, %v135
    %vm199 = vcmp.eq.s32.totalorder %v183, %v135
    %v200 = vsel %vm184, 1, 0
    %v201 = vsel %vm185, 1, 0
    %v202 = vsel %vm186, 1, 0
    %v203 = vsel %vm187, 1, 0
    %v204 = vsel %vm188, 1, 0
    %v205 = vsel %vm189, 1, 0
    %v206 = vsel %vm190, 1, 0
    %v207 = vsel %vm191, 1, 0
    %v208 = vsel %vm192, 1, 0
    %v209 = vsel %vm193, 1, 0
    %v210 = vsel %vm194, 1, 0
    %v211 = vsel %vm195, 1, 0
    %v212 = vsel %vm196, 1, 0
    %v213 = vsel %vm197, 1, 0
    %v214 = vsel %vm198, 1, 0
    %v215 = vsel %vm199, 1, 0
    %v216 = vcvt.s32.f32 %v200
    %v217 = vcvt.s32.f32 %v201
    %v218 = vcvt.s32.f32 %v202
    %v219 = vcvt.s32.f32 %v203
    %v220 = vcvt.s32.f32 %v204
    %v221 = vcvt.s32.f32 %v205
    %v222 = vcvt.s32.f32 %v206
    %v223 = vcvt.s32.f32 %v207
    %v224 = vcvt.s32.f32 %v208
    %v225 = vcvt.s32.f32 %v209
    %v226 = vcvt.s32.f32 %v210
    %v227 = vcvt.s32.f32 %v211
    %v228 = vcvt.s32.f32 %v212
    %v229 = vcvt.s32.f32 %v213
    %v230 = vcvt.s32.f32 %v214
    %v231 = vcvt.s32.f32 %v215
    %vm232 = vcmask 64512
    %v233 = vsel %vm232, %v216, 0.0
    %v234 = vsel %vm232, %v217, 0.0
    %v235 = vadd.f32 %v233, %v234
    %v236 = vsel %vm232, %v218, 0.0
    %v237 = vadd.f32 %v235, %v236
    %v238 = vsel %vm232, %v219, 0.0
    %v239 = vadd.f32 %v237, %v238
    %v240 = vsel %vm232, %v220, 0.0
    %v241 = vadd.f32 %v239, %v240
    %v242 = vsel %vm232, %v221, 0.0
    %v243 = vadd.f32 %v241, %v242
    %v244 = vsel %vm232, %v222, 0.0
    %v245 = vadd.f32 %v243, %v244
    %v246 = vsel %vm232, %v223, 0.0
    %v247 = vadd.f32 %v245, %v246
    %v248 = vsel %vm232, %v224, 0.0
    %v249 = vadd.f32 %v247, %v248
    %v250 = vsel %vm232, %v225, 0.0
    %v251 = vadd.f32 %v249, %v250
    %v252 = vsel %vm232, %v226, 0.0
    %v253 = vadd.f32 %v251, %v252
    %v254 = vsel %vm232, %v227, 0.0
    %v255 = vadd.f32 %v253, %v254
    %v256 = vsel %vm232, %v228, 0.0
    %v257 = vadd.f32 %v255, %v256
    %v258 = vsel %vm232, %v229, 0.0
    %v259 = vadd.f32 %v257, %v258
    %v260 = vsel %vm232, %v230, 0.0
    %v261 = vadd.f32 %v259, %v260
    %v262 = vsel %vm232, %v231, 0.0
    %v263 = vadd.f32 %v261, %v262
    %v264 = vrot.slane %v263, 4
    %v265 = vadd.f32 %v263, %v264
    %v266 = vrot.slane %v265, 2
    %v267 = vadd.f32 %v265, %v266
    %v268 = vrot.slane %v267, 1
    %v269 = vadd.f32 %v267, %v268
    %v270 = vmul.f32 %v33, %v33
    %v271 = vmul.f32 %v34, %v34
    %v272 = vmul.f32 %v35, %v35
    %v273 = vmul.f32 %v36, %v36
    %v274 = vmul.f32 %v37, %v37
    %v275 = vmul.f32 %v38, %v38
    %v276 = vmul.f32 %v39, %v39
    %v277 = vmul.f32 %v40, %v40
    %v278 = vmul.f32 %v41, %v41
    %v279 = vmul.f32 %v42, %v42
    %v280 = vmul.f32 %v43, %v43
    %v281 = vmul.f32 %v44, %v44
    %v282 = vmul.f32 %v45, %v45
    %v283 = vmul.f32 %v46, %v46
    %v284 = vmul.f32 %v47, %v47
    %v285 = vmul.f32 %v48, %v48
    %286 = vadd.xlane.f32.xlu0 %v270
    %v287 = vpop.xlane.xlu0 %286
    %288 = vadd.xlane.f32.xlu0 %v271
    %v289 = vpop.xlane.xlu0 %288
    %290 = vadd.xlane.f32.xlu0 %v272
    %v291 = vpop.xlane.xlu0 %290
    %292 = vadd.xlane.f32.xlu0 %v273
    %v293 = vpop.xlane.xlu0 %292
    %294 = vadd.xlane.f32.xlu0 %v274
    %v295 = vpop.xlane.xlu0 %294
    %296 = vadd.xlane.f32.xlu0 %v275
    %v297 = vpop.xlane.xlu0 %296
    %298 = vadd.xlane.f32.xlu0 %v276
    %v299 = vpop.xlane.xlu0 %298
    %300 = vadd.xlane.f32.xlu0 %v277
    %v301 = vpop.xlane.xlu0 %300
    %302 = vadd.xlane.f32.xlu0 %v278
    %v303 = vpop.xlane.xlu0 %302
    %304 = vadd.xlane.f32.xlu0 %v279
    %v305 = vpop.xlane.xlu0 %304
    %306 = vadd.xlane.f32.xlu0 %v280
    %v307 = vpop.xlane.xlu0 %306
    %308 = vadd.xlane.f32.xlu0 %v281
    %v309 = vpop.xlane.xlu0 %308
    %310 = vadd.xlane.f32.xlu0 %v282
    %v311 = vpop.xlane.xlu0 %310
    %312 = vadd.xlane.f32.xlu0 %v283
    %v313 = vpop.xlane.xlu0 %312
    %314 = vadd.xlane.f32.xlu0 %v284
    %v315 = vpop.xlane.xlu0 %314
    %316 = vadd.xlane.f32.xlu0 %v285
    %v317 = vpop.xlane.xlu0 %316
    %v318 = vmul.f32 %v216, %v287
    %v319 = vmul.f32 %v217, %v289
    %v320 = vmul.f32 %v218, %v291
    %v321 = vmul.f32 %v219, %v293
    %v322 = vmul.f32 %v220, %v295
    %v323 = vmul.f32 %v221, %v297
    %v324 = vmul.f32 %v222, %v299
    %v325 = vmul.f32 %v223, %v301
    %v326 = vmul.f32 %v224, %v303
    %v327 = vmul.f32 %v225, %v305
    %v328 = vmul.f32 %v226, %v307
    %v329 = vmul.f32 %v227, %v309
    %v330 = vmul.f32 %v228, %v311
    %v331 = vmul.f32 %v229, %v313
    %v332 = vmul.f32 %v230, %v315
    %v333 = vmul.f32 %v231, %v317
    %v334 = vsel %vm232, %v318, 0.0
    %v335 = vsel %vm232, %v319, 0.0
    %v336 = vadd.f32 %v334, %v335
    %v337 = vsel %vm232, %v320, 0.0
    %v338 = vadd.f32 %v336, %v337
    %v339 = vsel %vm232, %v321, 0.0
    %v340 = vadd.f32 %v338, %v339
    %v341 = vsel %vm232, %v322, 0.0
    %v342 = vadd.f32 %v340, %v341
    %v343 = vsel %vm232, %v323, 0.0
    %v344 = vadd.f32 %v342, %v343
    %v345 = vsel %vm232, %v324, 0.0
    %v346 = vadd.f32 %v344, %v345
    %v347 = vsel %vm232, %v325, 0.0
    %v348 = vadd.f32 %v346, %v347
    %v349 = vsel %vm232, %v326, 0.0
    %v350 = vadd.f32 %v348, %v349
    %v351 = vsel %vm232, %v327, 0.0
    %v352 = vadd.f32 %v350, %v351
    %v353 = vsel %vm232, %v328, 0.0
    %v354 = vadd.f32 %v352, %v353
    %v355 = vsel %vm232, %v329, 0.0
    %v356 = vadd.f32 %v354, %v355
    %v357 = vsel %vm232, %v330, 0.0
    %v358 = vadd.f32 %v356, %v357
    %v359 = vsel %vm232, %v331, 0.0
    %v360 = vadd.f32 %v358, %v359
    %v361 = vsel %vm232, %v332, 0.0
    %v362 = vadd.f32 %v360, %v361
    %v363 = vsel %vm232, %v333, 0.0
    %v364 = vadd.f32 %v362, %v363
    %v365 = vrot.slane %v364, 4
    %v366 = vadd.f32 %v364, %v365
    %v367 = vrot.slane %v366, 2
    %v368 = vadd.f32 %v366, %v367
    %v369 = vrot.slane %v368, 1
    %v370 = vadd.f32 %v368, %v369
    %vm371 = vcmp.eq.s32.totalorder %v50, %v134
    %v372 = vsel %vm371, %v132, 0.0
    %v373 = vsel %vm232, %v372, 0.0
    %v374 = vrot.slane %v373, 4
    %v375 = vadd.f32 %v373, %v374
    %v376 = vrot.slane %v375, 2
    %v377 = vadd.f32 %v375, %v376
    %v378 = vrot.slane %v377, 1
    %v379 = vadd.f32 %v377, %v378
    %v380 = vmax.f32 %v269, 1.0
    %v381 = vrcp.pop %v380
    %v382 = vmul.f32 1.0, %v381
    %v383 = vmul.f32 %v370, %v382
    %v384 = vmul.f32 %v382, %v382
    %v385 = vmul.f32 %v379, %v384
    %v386 = vsub.f32 %v383, %v385
    %vm387 = vcmask 57344
    %388 = vst.msk [vmem:[#allocation2] sm:$0x1] %vm387, %v386
    // Predicated region
    $region14: #{tpu_custom_call.1} parent=1 // pred_check
      _
    $region15: #{tpu_custom_call.1} parent=1 // pred_check_branch
      %390 = sbr.rel (0) target = $region17
    $region16: #{tpu_custom_call.1} parent=1 // pred_region
      %s392 = ssub.s32 16, 16
      %393 = vsyncadd [#allocation3], %s392
      %s395 = sshll.u32 [#allocation2], 4
      %s396 = int_to_ptr.vmem [resolvable:$true] %s395
      %398 = dma.vmem_to_hbm [thread:$0]  %s396, 16, %s3, [#allocation3]
    $region17: #{tpu_custom_call.1} parent=1 // pred_fallthru
      _
    // Predicated region
    $region18: #{tpu_custom_call.1} parent=1 // pred_check
      _
    $region19: #{tpu_custom_call.1} parent=1 // pred_check_branch
      %400 = sbr.rel (0) target = $region21
    $region20: #{tpu_custom_call.1} parent=1 // pred_region
      %401 = dma.done [#allocation3], 16
    $region21: #{tpu_custom_call.1} parent=1 // pred_fallthru
      _
    %402 = vsyncpa [#allocation3], 1

</llo_original>
